<compile_context>
chip_gen: v7x
topology: tpu7x:2x2x1
jax: 0.10.0
libtpu: 0.0.40
codegen_flags: <defaults>
</compile_context>

<pallas_src>
import functools

import jax
import jax.numpy as jnp
import numpy as np
from jax import lax
from jax.experimental import pallas as pl
from jax.experimental.pallas import tpu as pltpu

_HUGE_NEG = -1e20          # same masking constant as the PyTorch module
_STAT_ROWS = 8             # rows: logprob / entropy / value / action (+4 pad)


def _agent_kernel(transposed, x_ref, w1_ref, b1_ref, wv_ref, wa_ref, scal_ref,
                  maskadd_ref, stats_ref, ulogits_ref):
    Bt, N, F = x_ref.shape
    H = w1_ref.shape[1]
    ba = scal_ref[0]            # action-head bias (SMEM scalar)
    bv = scal_ref[1]            # value-head bias  (SMEM scalar)

    # --- "gnn": per-node Linear(F->H) + tanh (single flattened MXU matmul) ---
    x2 = x_ref[...].reshape(Bt * N, F)                                  # bf16
    h2 = jnp.dot(x2, w1_ref[...], preferred_element_type=jnp.float32)   # f32 acc
    h2 = jnp.tanh(h2 + b1_ref[...])                                     # f32 epilogue
    h = h2.reshape(Bt, N, H)                                            # free view (N % 8 == 0)

    # --- heads: per-node logits + per-node value contribution ---
    logits = jnp.sum(h * wa_ref[...].reshape(1, 1, H), axis=-1) + ba    # [Bt, N]
    v_pn = jnp.sum(h * wv_ref[...].reshape(1, 1, H), axis=-1) + bv      # [Bt, N]
    # value = mean_n(v_pn)  (== value_net(mean_n(node_features)) by linearity)

    # --- action mask (additive f32 mask: 0 or -1e20) + log-softmax ---
    mask_add = maskadd_ref[...]
    maskb = mask_add > jnp.float32(-1.0)
    mlogits = logits + mask_add
    m = jnp.max(mlogits, axis=-1, keepdims=True)
    e = jnp.exp(mlogits - m)
    s = jnp.sum(e, axis=-1, keepdims=True)
    nlogits = mlogits - (m + jnp.log(s))                                # normalized log-probs
    probs = e * pl.reciprocal(s, approx=False)

    # --- deterministic action = argmax(probs) (ties -> first index) ---
    iota = lax.broadcasted_iota(jnp.int32, (Bt, N), 1)
    action_col = jnp.min(jnp.where(mlogits == m, iota, N), axis=-1, keepdims=True)
    onehot = (iota == action_col).astype(jnp.float32)
    p_log_p = jnp.where(maskb, nlogits * probs, jnp.float32(0.0))       # masked entropy terms

    if transposed:
        # Lane-dense outputs: batch on the 128-lane axis.  The per-row reductions
        # over N double as the (Bt,*) -> (*,Bt) transpose by routing them through
        # the (idle) MXU: stats[r, b] = sum_n sel_r[n] * comp_r[b, n].
        dn = (((1,), (1,)), ((), ()))

        def mm(w, a):
            return lax.dot_general(w, a, dn, preferred_element_type=jnp.float32)

        row = lax.broadcasted_iota(jnp.int32, (_STAT_ROWS, N), 0)

        def sel(r, scale):
            return jnp.where(row == r, jnp.float32(scale), jnp.float32(0.0))

        stats_ref[...] = (mm(sel(0, 1.0), nlogits * onehot)                       # log_prob
                          + mm(sel(1, -1.0), p_log_p)                             # entropy
                          + mm(sel(2, 1.0 / N), v_pn)                             # value
                          + mm(sel(3, 1.0), iota.astype(jnp.float32) * onehot))   # action idx
        ident_n = (lax.broadcasted_iota(jnp.int32, (N, N), 0)
                   == lax.broadcasted_iota(jnp.int32, (N, N), 1)).astype(jnp.float32)
        ulogits_ref[...] = mm(ident_n, logits)                                    # [N, Bt]
    else:
        # Small / non-128-aligned batches (single grid step): row-major outputs.
        logprob = jnp.sum(nlogits * onehot, axis=-1, keepdims=True)
        entropy = -jnp.sum(p_log_p, axis=-1, keepdims=True)
        value = jnp.mean(v_pn, axis=-1, keepdims=True)
        lane = lax.broadcasted_iota(jnp.int32, (Bt, _STAT_ROWS), 1)
        stats_ref[...] = (jnp.where(lane == 0, logprob, 0.0)
                          + jnp.where(lane == 1, entropy, 0.0)
                          + jnp.where(lane == 2, value, 0.0)
                          + jnp.where(lane == 3, action_col.astype(jnp.float32), 0.0))
        ulogits_ref[...] = logits


def _choose_tiling(B, N, F, H, vmem_budget=40 * 1024 * 1024):
    """Pick the batch tile.  Returns (bt, B_pad, transposed_outputs)."""
    # Per-batch-row VMEM residency: double-buffered bf16 x tile, f32 h/h2
    # intermediates and a few (N,)-wide temporaries.  Budget sized for v7x
    # (64 MiB physical VMEM) so one code path works on v5e/v6e/v7x.
    per_row = 2 * (N * F * 2) + 3 * (N * H * 4) + 8 * N * 4 + 128
    cap = max(128, vmem_budget // per_row)
    if B <= 256:
        bt = B                              # tiny batch: single whole-batch tile
    else:
        bt = 128
        for c in (4096, 2048, 1024, 512, 256, 128):
            # prefer >= 2 grid steps (v7x has 2 TensorCores per chip)
            if c <= cap and c <= B // 2:
                bt = c
                break
    B_pad = ((B + bt - 1) // bt) * bt
    transposed = (bt % 128 == 0)            # lane-dense transposed outputs
    return bt, B_pad, transposed


def agent_forward(x, action_masks, params):
    """Deterministic Agent.get_action_and_value.

    Returns (action, log_prob, entropy, value, unmasked_logits)."""
    B, N, F = x.shape
    H = params['w1'].shape[-1]
    bt, B_pad, transposed = _choose_tiling(B, N, F, H)

    x_bf = x.astype(jnp.bfloat16)
    mask_add = jnp.where(action_masks.astype(bool),
                         jnp.float32(0.0), jnp.float32(_HUGE_NEG))
    if B_pad != B:
        pad = B_pad - B
        x_bf = jnp.pad(x_bf, ((0, pad), (0, 0), (0, 0)))
        mask_add = jnp.pad(mask_add, ((0, pad), (0, 0)), constant_values=_HUGE_NEG)

    w1 = params['w1'].astype(jnp.bfloat16)                       # [F, H], passed once
    b1 = params['b1'].reshape(1, H).astype(jnp.float32)
    wv = params['wv'].reshape(1, H).astype(jnp.float32)
    wa = params['wa'].reshape(1, H).astype(jnp.float32)
    scal = jnp.stack([params['ba'].reshape(()),
                      params['bv'].reshape(())]).astype(jnp.float32)   # SMEM scalars

    grid = (B_pad // bt,)
    in_specs = [
        pl.BlockSpec((bt, N, F), lambda b: (b, 0, 0)),           # x (bf16, tiled)
        pl.BlockSpec((F, H), lambda b: (0, 0)),                  # w1 (resident)
        pl.BlockSpec((1, H), lambda b: (0, 0)),                  # b1
        pl.BlockSpec((1, H), lambda b: (0, 0)),                  # wv
        pl.BlockSpec((1, H), lambda b: (0, 0)),                  # wa
        pl.BlockSpec(memory_space=pltpu.MemorySpace.SMEM),       # [ba, bv]
        pl.BlockSpec((bt, N), lambda b: (b, 0)),                 # additive mask (f32)
    ]
    if transposed:
        out_specs = (pl.BlockSpec((_STAT_ROWS, bt), lambda b: (0, b)),
                     pl.BlockSpec((N, bt), lambda b: (0, b)))
        out_shape = (jax.ShapeDtypeStruct((_STAT_ROWS, B_pad), jnp.float32),
                     jax.ShapeDtypeStruct((N, B_pad), jnp.float32))
    else:
        out_specs = (pl.BlockSpec((bt, _STAT_ROWS), lambda b: (b, 0)),
                     pl.BlockSpec((bt, N), lambda b: (b, 0)))
        out_shape = (jax.ShapeDtypeStruct((B_pad, _STAT_ROWS), jnp.float32),
                     jax.ShapeDtypeStruct((B_pad, N), jnp.float32))

    stats, ulogits = pl.pallas_call(
        functools.partial(_agent_kernel, transposed),
        grid=grid,
        in_specs=in_specs,
        out_specs=out_specs,
        out_shape=out_shape,
        compiler_params=pltpu.CompilerParams(
            dimension_semantics=("parallel",),
            vmem_limit_bytes=48 * 1024 * 1024,
        ),
    )(x_bf, w1, b1, wv, wa, scal, mask_add)

    if transposed:
        logprob = stats[0, :B]
        entropy = stats[1, :B]
        value = stats[2, :B][:, None]
        action = stats[3, :B].astype(jnp.int32)
        unmasked_logits = ulogits[:, :B].T
    else:
        logprob = stats[:B, 0]
        entropy = stats[:B, 1]
        value = stats[:B, 2:3]
        action = stats[:B, 3].astype(jnp.int32)
        unmasked_logits = ulogits[:B, :]
    return action, logprob, entropy, value, unmasked_logits


def _reference(x, mask, params):
    """Pure-JAX reference mirroring the PyTorch semantics (deterministic path).

    Uses the same bf16 rounding of the matmul inputs as the kernel."""
    xb = x.astype(jnp.bfloat16).astype(jnp.float32)
    w1b = params['w1'].astype(jnp.bfloat16).astype(jnp.float32)
    h = jnp.tanh(jnp.einsum('bnf,fh->bnh', xb, w1b) + params['b1'])
    g = jnp.mean(h, axis=1)
    value = g @ params['wv'] + params['bv']                              # [B, 1]
    logits = jnp.einsum('bnh,h->bn', h, params['wa'][:, 0]) + params['ba'][0]
    mlogits = jnp.where(mask, logits, jnp.float32(_HUGE_NEG))
    nlogits = mlogits - jax.nn.logsumexp(mlogits, axis=-1, keepdims=True)
    probs = jax.nn.softmax(mlogits, axis=-1)
    p_log_p = jnp.where(mask, nlogits * probs, 0.0)
    entropy = -jnp.sum(p_log_p, axis=-1)
    return logits, mlogits, nlogits, entropy, value


def _check(name, x, mask, params, outs, atol=5e-4):
    action, logprob, entropy, value, ulogits = map(np.asarray, outs)
    rlogits, rml, rnl, rent, rval = map(np.asarray, _reference(x, mask, params))
    B = x.shape[0]
    rows = np.arange(B)
    # Action must be a (tie-tolerant) argmax of the reference masked logits.
    gap = rml.max(axis=-1) - rml[rows, action]
    assert np.all(gap <= 1e-3), (name, float(gap.max()))
    # log_prob evaluated at the kernel's chosen action.
    assert np.allclose(logprob, rnl[rows, action], atol=atol, rtol=atol), name
    assert np.allclose(entropy, rent, atol=atol, rtol=atol), name
    assert np.allclose(value, rval, atol=atol, rtol=atol), name
    assert np.allclose(ulogits, rlogits, atol=atol, rtol=atol), name


if __name__ == "__main__":
    N, F, H = 8, 16, 32
    key = jax.random.PRNGKey(0)
    kp1, kp2, kp3, kp4 = jax.random.split(key, 4)
    params = {
        'w1': jax.random.normal(kp1, (F, H), jnp.float32) / np.sqrt(F),
        'b1': jax.random.normal(kp2, (H,), jnp.float32) * 0.01,
        'wv': jax.random.normal(kp3, (H, 1), jnp.float32) / np.sqrt(H),
        'bv': jnp.full((1,), 0.1, jnp.float32),
        'wa': jax.random.normal(kp4, (H, 1), jnp.float32) / np.sqrt(H),
        'ba': jnp.full((1,), -0.05, jnp.float32),
    }

    # Small shape implied by the module (batch=2, nodes=8, features=16, hidden=32).
    x_small = jax.random.normal(jax.random.PRNGKey(1), (2, N, F), jnp.float32)
    mask_small = jnp.array([[1, 1, 1, 1, 1, 1, 0, 0],
                            [1, 1, 1, 1, 1, 0, 0, 0]], dtype=jnp.bool_)
    outs = jax.block_until_ready(agent_forward(x_small, mask_small, params))
    _check("small", x_small, mask_small, params, outs)

    # Larger batches: exercise the lane-dense transposed output path, the
    # multi-step grid (>=2 steps for v7x megacore) and the ragged-batch padding.
    for B in (512, 300):
        xb = jax.random.normal(jax.random.PRNGKey(B), (B, N, F), jnp.float32)
        mb = jax.random.bernoulli(jax.random.PRNGKey(B + 1), 0.7, (B, N))
        mb = mb.at[:, 0].set(True)          # at least one legal action per row
        outs = jax.block_until_ready(agent_forward(xb, mb, params))
        _check("B=%d" % B, xb, mb, params, outs)

    print("KERNEL_OK")
</pallas_src>

<mosaic_0001>
module attributes {stable_mosaic.version = 11 : i64} {
  func.func @_agent_kernel(%arg0: i32, %arg1: memref<2x8x16xbf16, #tpu.memory_space<vmem>>, %arg2: memref<16x32xbf16, #tpu.memory_space<vmem>>, %arg3: memref<1x32xf32, #tpu.memory_space<vmem>>, %arg4: memref<1x32xf32, #tpu.memory_space<vmem>>, %arg5: memref<1x32xf32, #tpu.memory_space<vmem>>, %arg6: memref<2xf32, #tpu.memory_space<smem>>, %arg7: memref<2x8xf32, #tpu.memory_space<vmem>>, %arg8: memref<2x8xf32, #tpu.memory_space<vmem>>, %arg9: memref<2x8xf32, #tpu.memory_space<vmem>>) attributes {dimension_semantics = [#tpu.dimension_semantics<parallel>], iteration_bounds = array<i64: 1>, scalar_prefetch = 0 : i64, scratch_operands = 0 : i64, tpu.core_type = #tpu.core_type<tc>, window_params = [{transform_indices = @transform_0, window_bounds = array<i64: 2, 8, 16>}, {pipeline_mode = #tpu.pipeline_mode<synchronous>, transform_indices = @transform_1, window_bounds = array<i64: 16, 32>}, {pipeline_mode = #tpu.pipeline_mode<synchronous>, transform_indices = @transform_2, window_bounds = array<i64: 1, 32>}, {pipeline_mode = #tpu.pipeline_mode<synchronous>, transform_indices = @transform_3, window_bounds = array<i64: 1, 32>}, {pipeline_mode = #tpu.pipeline_mode<synchronous>, transform_indices = @transform_4, window_bounds = array<i64: 1, 32>}, {transform_indices = @transform_5, window_bounds = array<i64: 2>}, {transform_indices = @transform_6, window_bounds = array<i64: 2, 8>}, {transform_indices = @transform_7, window_bounds = array<i64: 2, 8>}, {transform_indices = @transform_8, window_bounds = array<i64: 2, 8>}]} {
    %c0 = arith.constant 0 : index
    %0 = memref.load %arg6[%c0] : memref<2xf32, #tpu.memory_space<smem>>
    %c1 = arith.constant 1 : index
    %1 = memref.load %arg6[%c1] : memref<2xf32, #tpu.memory_space<smem>>
    %c0_0 = arith.constant 0 : index
    %c0_1 = arith.constant 0 : index
    %c0_2 = arith.constant 0 : index
    %2 = vector.load %arg1[%c0_0, %c0_1, %c0_2] : memref<2x8x16xbf16, #tpu.memory_space<vmem>>, vector<2x8x16xbf16>
    %3 = vector.shape_cast %2 : vector<2x8x16xbf16> to vector<16x16xbf16>
    %c0_3 = arith.constant 0 : index
    %c0_4 = arith.constant 0 : index
    %4 = vector.load %arg2[%c0_3, %c0_4] : memref<16x32xbf16, #tpu.memory_space<vmem>>, vector<16x32xbf16>
    %cst = arith.constant dense<0.000000e+00> : vector<16x32xf32>
    %5 = tpu.matmul %3, %4, %cst {dimension_numbers = #tpu.dot_dimension_numbers<[1], [0], [0], [1], [0, 0, 1, 1], [], []>} : vector<16x16xbf16>, vector<16x32xbf16>, vector<16x32xf32> -> vector<16x32xf32>
    %c0_5 = arith.constant 0 : index
    %c0_6 = arith.constant 0 : index
    %6 = vector.load %arg3[%c0_5, %c0_6] : memref<1x32xf32, #tpu.memory_space<vmem>>, vector<1x32xf32>
    %7 = vector.broadcast %6 : vector<1x32xf32> to vector<16x32xf32>
    %8 = arith.addf %5, %7 : vector<16x32xf32>
    %9 = math.tanh %8 : vector<16x32xf32>
    %10 = vector.shape_cast %9 : vector<16x32xf32> to vector<2x8x32xf32>
    %c0_7 = arith.constant 0 : index
    %c0_8 = arith.constant 0 : index
    %11 = vector.load %arg5[%c0_7, %c0_8] : memref<1x32xf32, #tpu.memory_space<vmem>>, vector<1x32xf32>
    %12 = vector.shape_cast %11 : vector<1x32xf32> to vector<1x1x32xf32>
    %13 = vector.broadcast %12 : vector<1x1x32xf32> to vector<2x8x32xf32>
    %14 = arith.mulf %10, %13 : vector<2x8x32xf32>
    %cst_9 = arith.constant dense<0.000000e+00> : vector<2x8xf32>
    %15 = vector.multi_reduction <add>, %14, %cst_9 [2] : vector<2x8x32xf32> to vector<2x8xf32>
    %16 = vector.broadcast %0 : f32 to vector<2x8xf32>
    %17 = arith.addf %15, %16 : vector<2x8xf32>
    %c0_10 = arith.constant 0 : index
    %c0_11 = arith.constant 0 : index
    %18 = vector.load %arg4[%c0_10, %c0_11] : memref<1x32xf32, #tpu.memory_space<vmem>>, vector<1x32xf32>
    %19 = vector.shape_cast %18 : vector<1x32xf32> to vector<1x1x32xf32>
    %20 = vector.broadcast %19 : vector<1x1x32xf32> to vector<2x8x32xf32>
    %21 = arith.mulf %10, %20 : vector<2x8x32xf32>
    %cst_12 = arith.constant dense<0.000000e+00> : vector<2x8xf32>
    %22 = vector.multi_reduction <add>, %21, %cst_12 [2] : vector<2x8x32xf32> to vector<2x8xf32>
    %23 = vector.broadcast %1 : f32 to vector<2x8xf32>
    %24 = arith.addf %22, %23 : vector<2x8xf32>
    %c0_13 = arith.constant 0 : index
    %c0_14 = arith.constant 0 : index
    %25 = vector.load %arg7[%c0_13, %c0_14] : memref<2x8xf32, #tpu.memory_space<vmem>>, vector<2x8xf32>
    %cst_15 = arith.constant -1.000000e+00 : f32
    %26 = vector.broadcast %cst_15 : f32 to vector<2x8xf32>
    %27 = arith.cmpf ogt, %25, %26 : vector<2x8xf32>
    %28 = arith.addf %17, %25 : vector<2x8xf32>
    %cst_16 = arith.constant dense<0xFF800000> : vector<2xf32>
    %29 = vector.multi_reduction <maximumf>, %28, %cst_16 [1] : vector<2x8xf32> to vector<2xf32>
    %30 = vector.shape_cast %29 : vector<2xf32> to vector<2x1xf32>
    %31 = vector.broadcast %30 : vector<2x1xf32> to vector<2x8xf32>
    %32 = arith.subf %28, %31 : vector<2x8xf32>
    %33 = math.exp %32 : vector<2x8xf32>
    %cst_17 = arith.constant dense<0.000000e+00> : vector<2xf32>
    %34 = vector.multi_reduction <add>, %33, %cst_17 [1] : vector<2x8xf32> to vector<2xf32>
    %35 = vector.shape_cast %34 : vector<2xf32> to vector<2x1xf32>
    %36 = math.log %35 : vector<2x1xf32>
    %37 = arith.addf %30, %36 : vector<2x1xf32>
    %38 = vector.broadcast %37 : vector<2x1xf32> to vector<2x8xf32>
    %39 = arith.subf %28, %38 : vector<2x8xf32>
    %40 = tpu.reciprocal %35 : vector<2x1xf32> -> vector<2x1xf32>
    %41 = vector.broadcast %40 : vector<2x1xf32> to vector<2x8xf32>
    %42 = arith.mulf %33, %41 : vector<2x8xf32>
    %43 = tpu.iota {dimensions = array<i32: 1>} : vector<2x8xi32>
    %44 = vector.broadcast %30 : vector<2x1xf32> to vector<2x8xf32>
    %45 = arith.cmpf oeq, %28, %44 : vector<2x8xf32>
    %c8_i32 = arith.constant 8 : i32
    %46 = vector.broadcast %c8_i32 : i32 to vector<2x8xi32>
    %47 = arith.select %45, %43, %46 : vector<2x8xi1>, vector<2x8xi32>
    %cst_18 = arith.constant dense<2147483647> : vector<2xi32>
    %48 = vector.multi_reduction <minsi>, %47, %cst_18 [1] : vector<2x8xi32> to vector<2xi32>
    %49 = vector.shape_cast %48 : vector<2xi32> to vector<2x1xi32>
    %50 = vector.broadcast %49 : vector<2x1xi32> to vector<2x8xi32>
    %51 = arith.cmpi eq, %43, %50 : vector<2x8xi32>
    %52 = arith.extui %51 : vector<2x8xi1> to vector<2x8xi32>
    %53 = arith.sitofp %52 : vector<2x8xi32> to vector<2x8xf32>
    %54 = arith.mulf %39, %42 : vector<2x8xf32>
    %cst_19 = arith.constant 0.000000e+00 : f32
    %55 = vector.broadcast %cst_19 : f32 to vector<2x8xf32>
    %56 = arith.select %27, %54, %55 : vector<2x8xi1>, vector<2x8xf32>
    %57 = arith.mulf %39, %53 : vector<2x8xf32>
    %cst_20 = arith.constant dense<0.000000e+00> : vector<2xf32>
    %58 = vector.multi_reduction <add>, %57, %cst_20 [1] : vector<2x8xf32> to vector<2xf32>
    %59 = vector.shape_cast %58 : vector<2xf32> to vector<2x1xf32>
    %cst_21 = arith.constant dense<0.000000e+00> : vector<2xf32>
    %60 = vector.multi_reduction <add>, %56, %cst_21 [1] : vector<2x8xf32> to vector<2xf32>
    %61 = vector.shape_cast %60 : vector<2xf32> to vector<2x1xf32>
    %cst_22 = arith.constant 0.000000e+00 : f32
    %62 = vector.broadcast %cst_22 : f32 to vector<2x1xf32>
    %63 = arith.subf %62, %61 : vector<2x1xf32>
    %cst_23 = arith.constant dense<0.000000e+00> : vector<2xf32>
    %64 = vector.multi_reduction <add>, %24, %cst_23 [1] : vector<2x8xf32> to vector<2xf32>
    %65 = vector.shape_cast %64 : vector<2xf32> to vector<2x1xf32>
    %cst_24 = arith.constant 8.000000e+00 : f32
    %66 = vector.broadcast %cst_24 : f32 to vector<2x1xf32>
    %67 = arith.divf %65, %66 : vector<2x1xf32>
    %68 = tpu.iota {dimensions = array<i32: 1>} : vector<2x8xi32>
    %c0_i32 = arith.constant 0 : i32
    %69 = vector.broadcast %c0_i32 : i32 to vector<2x8xi32>
    %70 = arith.cmpi eq, %68, %69 : vector<2x8xi32>
    %cst_25 = arith.constant 0.000000e+00 : f32
    %71 = vector.shape_cast %59 : vector<2x1xf32> to vector<2x1xf32>
    %72 = vector.broadcast %71 : vector<2x1xf32> to vector<2x8xf32>
    %73 = vector.broadcast %cst_25 : f32 to vector<2x8xf32>
    %74 = arith.select %70, %72, %73 : vector<2x8xi1>, vector<2x8xf32>
    %c1_i32 = arith.constant 1 : i32
    %75 = vector.broadcast %c1_i32 : i32 to vector<2x8xi32>
    %76 = arith.cmpi eq, %68, %75 : vector<2x8xi32>
    %cst_26 = arith.constant 0.000000e+00 : f32
    %77 = vector.shape_cast %63 : vector<2x1xf32> to vector<2x1xf32>
    %78 = vector.broadcast %77 : vector<2x1xf32> to vector<2x8xf32>
    %79 = vector.broadcast %cst_26 : f32 to vector<2x8xf32>
    %80 = arith.select %76, %78, %79 : vector<2x8xi1>, vector<2x8xf32>
    %81 = arith.addf %74, %80 : vector<2x8xf32>
    %c2_i32 = arith.constant 2 : i32
    %82 = vector.broadcast %c2_i32 : i32 to vector<2x8xi32>
    %83 = arith.cmpi eq, %68, %82 : vector<2x8xi32>
    %cst_27 = arith.constant 0.000000e+00 : f32
    %84 = vector.shape_cast %67 : vector<2x1xf32> to vector<2x1xf32>
    %85 = vector.broadcast %84 : vector<2x1xf32> to vector<2x8xf32>
    %86 = vector.broadcast %cst_27 : f32 to vector<2x8xf32>
    %87 = arith.select %83, %85, %86 : vector<2x8xi1>, vector<2x8xf32>
    %88 = arith.addf %81, %87 : vector<2x8xf32>
    %c3_i32 = arith.constant 3 : i32
    %89 = vector.broadcast %c3_i32 : i32 to vector<2x8xi32>
    %90 = arith.cmpi eq, %68, %89 : vector<2x8xi32>
    %91 = arith.sitofp %49 : vector<2x1xi32> to vector<2x1xf32>
    %cst_28 = arith.constant 0.000000e+00 : f32
    %92 = vector.shape_cast %91 : vector<2x1xf32> to vector<2x1xf32>
    %93 = vector.broadcast %92 : vector<2x1xf32> to vector<2x8xf32>
    %94 = vector.broadcast %cst_28 : f32 to vector<2x8xf32>
    %95 = arith.select %90, %93, %94 : vector<2x8xi1>, vector<2x8xf32>
    %96 = arith.addf %88, %95 : vector<2x8xf32>
    %c0_29 = arith.constant 0 : index
    %c0_30 = arith.constant 0 : index
    %97 = vector.load %arg8[%c0_29, %c0_30] : memref<2x8xf32, #tpu.memory_space<vmem>>, vector<2x8xf32>
    tpu.vector_store %arg8[%c0_29, %c0_30], %96 {strides = array<i32>} : memref<2x8xf32, #tpu.memory_space<vmem>>, vector<2x8xf32>,
    %c0_31 = arith.constant 0 : index
    %c0_32 = arith.constant 0 : index
    %98 = vector.load %arg9[%c0_31, %c0_32] : memref<2x8xf32, #tpu.memory_space<vmem>>, vector<2x8xf32>
    tpu.vector_store %arg9[%c0_31, %c0_32], %17 {strides = array<i32>} : memref<2x8xf32, #tpu.memory_space<vmem>>, vector<2x8xf32>,
    return
  }
  func.func @transform_0(%arg0: i32) -> (i32, i32, i32) {
    %c0_i32 = arith.constant 0 : i32
    %c0_i32_0 = arith.constant 0 : i32
    %c0_i32_1 = arith.constant 0 : i32
    return %arg0, %c0_i32, %c0_i32_0 : i32, i32, i32
  }
  func.func @transform_1(%arg0: i32) -> (i32, i32) {
    %c0_i32 = arith.constant 0 : i32
    %c0_i32_0 = arith.constant 0 : i32
    %c0_i32_1 = arith.constant 0 : i32
    return %c0_i32, %c0_i32_0 : i32, i32
  }
  func.func @transform_2(%arg0: i32) -> (i32, i32) {
    %c0_i32 = arith.constant 0 : i32
    %c0_i32_0 = arith.constant 0 : i32
    %c0_i32_1 = arith.constant 0 : i32
    return %c0_i32, %c0_i32_0 : i32, i32
  }
  func.func @transform_3(%arg0: i32) -> (i32, i32) {
    %c0_i32 = arith.constant 0 : i32
    %c0_i32_0 = arith.constant 0 : i32
    %c0_i32_1 = arith.constant 0 : i32
    return %c0_i32, %c0_i32_0 : i32, i32
  }
  func.func @transform_4(%arg0: i32) -> (i32, i32) {
    %c0_i32 = arith.constant 0 : i32
    %c0_i32_0 = arith.constant 0 : i32
    %c0_i32_1 = arith.constant 0 : i32
    return %c0_i32, %c0_i32_0 : i32, i32
  }
  func.func @transform_5(%arg0: i32) -> i32 {
    %c0_i32 = arith.constant 0 : i32
    %c0_i32_0 = arith.constant 0 : i32
    return %c0_i32 : i32
  }
  func.func @transform_6(%arg0: i32) -> (i32, i32) {
    %c0_i32 = arith.constant 0 : i32
    %c0_i32_0 = arith.constant 0 : i32
    return %arg0, %c0_i32 : i32, i32
  }
  func.func @transform_7(%arg0: i32) -> (i32, i32) {
    %c0_i32 = arith.constant 0 : i32
    %c0_i32_0 = arith.constant 0 : i32
    return %arg0, %c0_i32 : i32, i32
  }
  func.func @transform_8(%arg0: i32) -> (i32, i32) {
    %c0_i32 = arith.constant 0 : i32
    %c0_i32_0 = arith.constant 0 : i32
    return %arg0, %c0_i32 : i32, i32
  }
}

</mosaic_0001>

<llo_original>
// kernel: tpu_custom_call.1
$region0: #{tpu_custom_call.1}
  #allocation0 [shape = 'u32[]', space=smem, size = 0x4, offset = 0x4, fixed_abs, tag = 'smem constant byte address 0x4 - core index']
  #allocation1 [shape = 'u32[144,128]{1,0:T(1,128)}', space=vmem, size = 0x12000, scoped, tag = 'internal scratch']
  %s0 = inlined_call_operand.hbm [shape: bf16[2,8,16], index: 0, kind: input, shape index: {}]
  %s1 = inlined_call_operand.hbm [shape: bf16[16,32], index: 1, kind: input, shape index: {}]
  %s2 = inlined_call_operand.vmem [shape: f32[1,32], index: 2, kind: input, shape index: {}]
  %s3 = inlined_call_operand.vmem [shape: f32[1,32], index: 3, kind: input, shape index: {}]
  %s4 = inlined_call_operand.vmem [shape: f32[1,32], index: 4, kind: input, shape index: {}]
  %s5 = inlined_call_operand.vmem [shape: f32[2], index: 5, kind: input, shape index: {}]
  %s6 = inlined_call_operand.vmem [shape: f32[2,8], index: 6, kind: input, shape index: {}]
  %s7 = inlined_call_operand.hbm [shape: f32[2,8], index: 7, kind: output, shape index: {0}]
  %s8 = inlined_call_operand.hbm [shape: f32[2,8], index: 8, kind: output, shape index: {1}]
  %9 = xla_tuple %s7, %s8
  %s10 = sld [smem:[#allocation0]]
  $region58: #{tpu_custom_call.1} parent=0
    _
  %s12 = ssub.s32 1, %s10
  %s13 = scalar_select 0, %s12, %s10
  $region1: #{tpu_custom_call.1} parent=0
    #allocation2 [shape = 'u8[4096]{0}', space=vmem, size = 0x1000, scoped, tag = 'input window, operand 0, single buffered']
    #allocation3 [shape = 's32[1]{0}', space=sflag, size = 0x4, scoped, tag = 'scoped memory for tpu_custom_call.1']
    #allocation4 [shape = 's32[1]{0}', space=sflag, size = 0x4, scoped, tag = 'scoped memory for tpu_custom_call.1']
    #allocation5 [shape = 's32[1]{0}', space=sflag, size = 0x4, scoped, tag = 'scoped memory for tpu_custom_call.1']
    #allocation6 [shape = 'u8[4096]{0}', space=vmem, size = 0x1000, scoped, tag = 'input window, operand 1, single buffered']
    #allocation7 [shape = 's32[1]{0}', space=sflag, size = 0x4, scoped, tag = 'scoped memory for tpu_custom_call.1']
    #allocation8 [shape = 'u8[512]{0}', space=smem, size = 0x200, scoped, tag = 'input window, operand 5, single buffered']
    #allocation9 [shape = 'u8[1024]{0}', space=vmem, size = 0x400, scoped, tag = 'output window, operand 0, single buffered']
    #allocation10 [shape = 'u8[1024]{0}', space=vmem, size = 0x400, scoped, tag = 'output window, operand 1, single buffered']
    #allocation11 [shape = 's32[1]{0}', space=sflag, size = 0x4, scoped, tag = 'scoped memory for tpu_custom_call.1']
    %14 = vsyncpa [#allocation3], 0
    %15 = vsyncpa [#allocation7], 0
    %16 = vsyncpa [#allocation5], 0
    %17 = vsyncpa [#allocation4], 0
    %18 = vsyncpa [#allocation11], 0
    // Predicated region
    $region2: #{tpu_custom_call.1} parent=1 // pred_check
      _
    $region3: #{tpu_custom_call.1} parent=1 // pred_check_branch
      %20 = sbr.rel (0) target = $region5
    $region4: #{tpu_custom_call.1} parent=1 // pred_region
      %s22 = ssub.s32 128, 128
      %23 = vsyncadd [#allocation3], %s22
      %s24 = sshll.u32 [#allocation2], 4
      %s25 = int_to_ptr.vmem [resolvable:$true] %s24
      %30 = dma.hbm_to_vmem [thread:$0]  %s0, 128, %s25, [#allocation3], 64, 64, 4
    $region5: #{tpu_custom_call.1} parent=1 // pred_fallthru
      _
    // Predicated region
    $region6: #{tpu_custom_call.1} parent=1 // pred_check
      _
    $region7: #{tpu_custom_call.1} parent=1 // pred_check_branch
      %32 = sbr.rel (0) target = $region9
    $region8: #{tpu_custom_call.1} parent=1 // pred_region
      %s34 = ssub.s32 128, 128
      %35 = vsyncadd [#allocation7], %s34
      %s36 = sshll.u32 [#allocation6], 4
      %s37 = int_to_ptr.vmem [resolvable:$true] %s36
      %42 = dma.hbm_to_vmem [thread:$0]  %s1, 128, %s37, [#allocation7], 64, 64, 4
    $region9: #{tpu_custom_call.1} parent=1 // pred_fallthru
      _
    // Predicated region
    $region10: #{tpu_custom_call.1} parent=1 // pred_check
      _
    $region11: #{tpu_custom_call.1} parent=1 // pred_check_branch
      %44 = sbr.rel (0) target = $region13
    $region12: #{tpu_custom_call.1} parent=1 // pred_region
      _
    $region13: #{tpu_custom_call.1} parent=1 // pred_fallthru
      _
    // Predicated region
    $region14: #{tpu_custom_call.1} parent=1 // pred_check
      _
    $region15: #{tpu_custom_call.1} parent=1 // pred_check_branch
      %46 = sbr.rel (0) target = $region17
    $region16: #{tpu_custom_call.1} parent=1 // pred_region
      _
    $region17: #{tpu_custom_call.1} parent=1 // pred_fallthru
      _
    // Predicated region
    $region18: #{tpu_custom_call.1} parent=1 // pred_check
      _
    $region19: #{tpu_custom_call.1} parent=1 // pred_check_branch
      %48 = sbr.rel (0) target = $region21
    $region20: #{tpu_custom_call.1} parent=1 // pred_region
      _
    $region21: #{tpu_custom_call.1} parent=1 // pred_fallthru
      _
    // Predicated region
    $region22: #{tpu_custom_call.1} parent=1 // pred_check
      _
    $region23: #{tpu_custom_call.1} parent=1 // pred_check_branch
      %50 = sbr.rel (0) target = $region25
    $region24: #{tpu_custom_call.1} parent=1 // pred_region
      %s52 = ssub.s32 16, 16
      %53 = vsyncadd [#allocation5], %s52
      %s55 = sshll.u32 %s5, 4
      %s56 = int_to_ptr.vmem [resolvable:$true] %s55
      %58 = dma.vmem_to_smem %s56, 16, [#allocation8], [#allocation5]
    $region25: #{tpu_custom_call.1} parent=1 // pred_fallthru
      _
    // Predicated region
    $region26: #{tpu_custom_call.1} parent=1 // pred_check
      _
    $region27: #{tpu_custom_call.1} parent=1 // pred_check_branch
      %60 = sbr.rel (0) target = $region29
    $region28: #{tpu_custom_call.1} parent=1 // pred_region
      _
    $region29: #{tpu_custom_call.1} parent=1 // pred_fallthru
      _
    // Predicated region
    $region30: #{tpu_custom_call.1} parent=1 // pred_check
      _
    $region31: #{tpu_custom_call.1} parent=1 // pred_check_branch
      %62 = sbr.rel (0) target = $region33
    $region32: #{tpu_custom_call.1} parent=1 // pred_region
      %63 = dma.done [#allocation3], 128
    $region33: #{tpu_custom_call.1} parent=1 // pred_fallthru
      _
    // Predicated region
    $region34: #{tpu_custom_call.1} parent=1 // pred_check
      _
    $region35: #{tpu_custom_call.1} parent=1 // pred_check_branch
      %65 = sbr.rel (0) target = $region37
    $region36: #{tpu_custom_call.1} parent=1 // pred_region
      %66 = dma.done [#allocation7], 128
    $region37: #{tpu_custom_call.1} parent=1 // pred_fallthru
      _
    // Predicated region
    $region38: #{tpu_custom_call.1} parent=1 // pred_check
      _
    $region39: #{tpu_custom_call.1} parent=1 // pred_check_branch
      %68 = sbr.rel (0) target = $region41
    $region40: #{tpu_custom_call.1} parent=1 // pred_region
      %69 = dma.done [#allocation5], 16
    $region41: #{tpu_custom_call.1} parent=1 // pred_fallthru
      _
    %70 = sfence
    %s72 = sld [smem:[#allocation8]]
    %s73 = sld [smem:[#allocation8 + $0x1]]
    %v74 = vld [vmem:[#allocation2] sm:$0xf]
    %v75 = vld [vmem:[#allocation2 + $0x4] sm:$0xf]
    %v76 = vld [vmem:[#allocation6] sm:$0xf]
    %v77 = vld [vmem:[#allocation6 + $0x4] sm:$0xf]
    %v78 = vld [vmem:[%s2] sm:$0x1]
    %v80 = vlaneseq
    %v81 = vshrl.u32 %v80, 7
    %v82 = vsub.s32 0, %v81
    %v83 = vrot.slane %v78, %v82
    %v87 = vunpack.c.l.b16 %v74
    %v88 = vunpack.c.l.b16 %v75
    %v89 = vpack.c.b16 %v88, %v87
    %v92 = vunpack.c.l.b16 %v76
    %v93 = vunpack.c.l.b16 %v77
    %v94 = vpack.c.b16 %v93, %v92
    %vm96 = vcmask 130048
    %v98 = vsel %vm96, %v89, 0
    %100 = vmatprep.subr.bf16.mxu0 0
    %101 = vmatpush1.bf16.msra.mxu0 %v94
    %102 = vmatprep.subr.bf16.mxu0 0
    %103 = vmatpush1.bf16.msra.mxu0 0
    %104 = vmatprep.subr.bf16.mxu0 0
    %105 = vmatpush1.bf16.msra.mxu0 0
    %106 = vmatprep.subr.bf16.mxu0 0
    %107 = vmatpush1.bf16.msra.mxu0 0
    %108 = vmatprep.subr.bf16.mxu0 0
    %109 = vmatpush1.bf16.msra.mxu0 0
    %110 = vmatprep.subr.bf16.mxu0 0
    %111 = vmatpush1.bf16.msra.mxu0 0
    %112 = vmatprep.subr.bf16.mxu0 0
    %113 = vmatpush1.bf16.msra.mxu0 0
    %114 = vmatprep.subr.bf16.mxu0 0
    %115 = vmatpush1.bf16.msra.mxu0 0
    %116 = vmatprep.subr.bf16.mxu0 0
    %117 = vmatpush1.bf16.msra.mxu0 0
    %118 = vmatprep.subr.bf16.mxu0 0
    %119 = vmatpush1.bf16.msra.mxu0 0
    %120 = vmatprep.subr.bf16.mxu0 0
    %121 = vmatpush1.bf16.msra.mxu0 0
    %122 = vmatprep.subr.bf16.mxu0 0
    %123 = vmatpush1.bf16.msra.mxu0 0
    %124 = vmatprep.subr.bf16.mxu0 0
    %125 = vmatpush1.bf16.msra.mxu0 0
    %126 = vmatprep.subr.bf16.mxu0 0
    %127 = vmatpush1.bf16.msra.mxu0 0
    %128 = vmatprep.subr.bf16.mxu0 0
    %129 = vmatpush1.bf16.msra.mxu0 0
    %130 = vmatprep.subr.bf16.mxu0 0
    %131 = vmatpush1.bf16.msra.mxu0 0
    %132 = vmatprep.mubr.bf16.mxu0 0
    %133 = vmatmul.mubr.bf16.gmra.mrb[0].mxu0 %v98
    %v134 = vpop.f32.mrb[0].mxu0
    %v135 = vadd.f32 %v83, %v134
    %v136 = vpop.f32.mrb[0].mxu0
    %v137 = vpop.f32.mrb[0].mxu0
    %v138 = vadd.f32 %v83, %v137
    %v139 = vpop.f32.mrb[0].mxu0
    %140 = vdwg.mxu0
    %v141 = vtanh.pop %v135
    %v142 = vtanh.pop %v138
    %v143 = vld [vmem:[%s4] sm:$0x1]
    %v145 = vlaneseq
    %v146 = vshrl.u32 %v145, 7
    %v147 = vsub.s32 0, %v146
    %v148 = vrot.slane %v143, %v147
    %v150 = vmul.f32 %v141, %v148
    %v151 = vmul.f32 %v142, %v148
    %vm152 = vcmask 261120
    %v153 = vsel %vm152, %v150, 0.0
    %154 = vadd.xlane.f32.xlu0 %v153
    %v155 = vpop.xlane.xlu0 %154
    %v156 = vsel %vm152, %v151, 0.0
    %157 = vadd.xlane.f32.xlu0 %v156
    %v158 = vpop.xlane.xlu0 %157
    %v159 = vstv %s72
    %v160 = vadd.f32 %v155, %v159
    %v161 = vadd.f32 %v158, %v159
    %v162 = vld [vmem:[%s3] sm:$0x1]
    %v164 = vlaneseq
    %v165 = vshrl.u32 %v164, 7
    %v166 = vsub.s32 0, %v165
    %v167 = vrot.slane %v162, %v166
    %v169 = vmul.f32 %v141, %v167
    %v170 = vmul.f32 %v142, %v167
    %v171 = vsel %vm152, %v169, 0.0
    %172 = vadd.xlane.f32.xlu0 %v171
    %v173 = vpop.xlane.xlu0 %172
    %v174 = vsel %vm152, %v170, 0.0
    %175 = vadd.xlane.f32.xlu0 %v174
    %v176 = vpop.xlane.xlu0 %175
    %v177 = vstv %s73
    %v178 = vadd.f32 %v173, %v177
    %v179 = vadd.f32 %v176, %v177
    %v180 = vld [vmem:[%s6] sm:$0x3]
    %vm181 = vcmp.gt.f32.partialorder %v180, -1.0
    %v183 = vlaneseq
    %v184 = vshrl.u32 %v183, 7
    %v185 = vsub.s32 0, %v184
    %v186 = vrot.slane %v180, %v185
    %188 = vbcast.lane.b32.xlu0 %v186, 256
    %v189 = vpop.permute.xlu0 %188
    %v190 = vlaneseq
    %v191 = vshrl.u32 %v190, 7
    %v192 = vsub.s32 1, %v191
    %v193 = vrot.slane %v180, %v192
    %195 = vbcast.lane.b32.xlu0 %v193, 256
    %v196 = vpop.permute.xlu0 %195
    %v199 = vadd.f32 %v160, %v189
    %v200 = vadd.f32 %v161, %v196
    %203 = vset.pattern.permute.xlu0 0
    %204 = vperm.xlu0 %203, %v199
    %v205 = vpop.permute.xlu0 %204
    %206 = vset.pattern.permute.xlu0 0
    %207 = vperm.xlu0 %206, %v200
    %v208 = vpop.permute.xlu0 %207
    %v209 = vlaneseq
    %v210 = vand.u32 %v209, 127
    %v211 = vlaneseq
    %v212 = vshrl.u32 %v211, 7
    %v213 = vsub.s32 %v210, %v212
    %v214 = vrot.slane %v205, %v213
    %v215 = vlaneseq
    %v216 = vshrl.u32 %v215, 7
    %v217 = vsub.s32 %v210, %v216
    %v218 = vrot.slane %v208, %v217
    %vm219 = vcmask 1041409
    %v220 = vsel %vm219, %v218, %v214
    %vm222 = vcmask 58368
    %v223 = vsel %vm222, %v220, -inf
    %224 = vmax.xlane.f32.xlu0 %v223
    %v225 = vpop.xlane.xlu0 %224
    %v227 = vlaneseq
    %v228 = vshrl.u32 %v227, 7
    %v229 = vsub.s32 0, %v228
    %v230 = vrot.slane %v225, %v229
    %v231 = vlaneseq
    %v232 = vshrl.u32 %v231, 7
    %v233 = vsub.s32 1, %v232
    %v234 = vrot.slane %v225, %v233
    %v237 = vsub.f32 %v199, %v230
    %v238 = vsub.f32 %v200, %v234
    %v239 = vmul.f32 %v237, 1.442695
    %v240 = vpow.pop %v239
    %v241 = vmul.f32 %v238, 1.442695
    %v242 = vpow.pop %v241
    %245 = vset.pattern.permute.xlu0 0
    %246 = vperm.xlu0 %245, %v240
    %v247 = vpop.permute.xlu0 %246
    %248 = vset.pattern.permute.xlu0 0
    %249 = vperm.xlu0 %248, %v242
    %v250 = vpop.permute.xlu0 %249
    %v251 = vlaneseq
    %v252 = vshrl.u32 %v251, 7
    %v253 = vsub.s32 %v210, %v252
    %v254 = vrot.slane %v247, %v253
    %v255 = vlaneseq
    %v256 = vshrl.u32 %v255, 7
    %v257 = vsub.s32 %v210, %v256
    %v258 = vrot.slane %v250, %v257
    %v259 = vsel %vm219, %v258, %v254
    %v261 = vsel %vm222, %v259, 0.0
    %262 = vadd.xlane.f32.xlu0 %v261
    %v263 = vpop.xlane.xlu0 %262
    %v264 = vlog2.pop %v263
    %v265 = vmul.f32 %v264, 0.6931472
    %v266 = vadd.f32 %v225, %v265
    %v268 = vlaneseq
    %v269 = vshrl.u32 %v268, 7
    %v270 = vsub.s32 0, %v269
    %v271 = vrot.slane %v266, %v270
    %v272 = vlaneseq
    %v273 = vshrl.u32 %v272, 7
    %v274 = vsub.s32 1, %v273
    %v275 = vrot.slane %v266, %v274
    %v278 = vsub.f32 %v199, %v271
    %v279 = vsub.f32 %v200, %v275
    %v280 = vrcp.pop %v263
    %v282 = vlaneseq
    %v283 = vshrl.u32 %v282, 7
    %v284 = vsub.s32 0, %v283
    %v285 = vrot.slane %v280, %v284
    %v286 = vlaneseq
    %v287 = vshrl.u32 %v286, 7
    %v288 = vsub.s32 1, %v287
    %v289 = vrot.slane %v280, %v288
    %v292 = vmul.f32 %v240, %v285
    %v293 = vmul.f32 %v242, %v289
    %vm294 = vcmp.eq.f32.partialorder %v199, %v230
    %vm295 = vcmp.eq.f32.partialorder %v200, %v234
    %297 = vbcast.lane.b32.xlu0 %v210, 256
    %v298 = vpop.permute.xlu0 %297
    %v299 = vsel %vm294, %v298, 8
    %v300 = vsel %vm295, %v298, 8
    %301 = vset.pattern.permute.xlu0 0
    %302 = vperm.xlu0 %301, %v299
    %v303 = vpop.permute.xlu0 %302
    %304 = vset.pattern.permute.xlu0 0
    %305 = vperm.xlu0 %304, %v300
    %v306 = vpop.permute.xlu0 %305
    %v307 = vlaneseq
    %v308 = vshrl.u32 %v307, 7
    %v309 = vsub.s32 %v210, %v308
    %v310 = vrot.slane %v303, %v309
    %v311 = vlaneseq
    %v312 = vshrl.u32 %v311, 7
    %v313 = vsub.s32 %v210, %v312
    %v314 = vrot.slane %v306, %v313
    %v315 = vsel %vm219, %v314, %v310
    %v316 = vsel %vm222, %v315, 2147483647
    %v317 = vand.u32 %v316, 65535
    %v318 = vshra.s32 %v316, 16
    %v319 = vcvt.s32.f32 %v317
    %v320 = vcvt.s32.f32 %v318
    %321 = vmin.xlane.f32.xlu0 %v320
    %v322 = vpop.xlane.xlu0 %321
    %vm323 = vcmp.eq.f32.partialorder %v320, %v322
    %v324 = vsel %vm323, %v319, inf
    %325 = vmin.xlane.f32.xlu0 %v324
    %v326 = vpop.xlane.xlu0 %325
    %v327 = vcvt.f32.s32 %v326
    %v328 = vcvt.f32.s32 %v322
    %v329 = vshll.u32 %v328, 16
    %v330 = vadd.s32 %v329, %v327
    %vm331 = vcmp.eq.s32.totalorder %v210, %v330
    %v332 = vsel %vm331, 1, 0
    %v333 = vcvt.s32.f32 %v332
    %v334 = vmul.f32 %v278, %v292
    %v335 = vmul.f32 %v279, %v293
    %338 = vset.pattern.permute.xlu0 0
    %339 = vperm.xlu0 %338, %v334
    %v340 = vpop.permute.xlu0 %339
    %341 = vset.pattern.permute.xlu0 0
    %342 = vperm.xlu0 %341, %v335
    %v343 = vpop.permute.xlu0 %342
    %v344 = vlaneseq
    %v345 = vshrl.u32 %v344, 7
    %v346 = vsub.s32 %v210, %v345
    %v347 = vrot.slane %v340, %v346
    %v348 = vlaneseq
    %v349 = vshrl.u32 %v348, 7
    %v350 = vsub.s32 %v210, %v349
    %v351 = vrot.slane %v343, %v350
    %v352 = vsel %vm219, %v351, %v347
    %v354 = vsel %vm181, %v352, 0.0
    %v356 = vlaneseq
    %v357 = vshrl.u32 %v356, 7
    %v358 = vsub.s32 0, %v357
    %v359 = vrot.slane %v333, %v358
    %361 = vbcast.lane.b32.xlu0 %v359, 256
    %v362 = vpop.permute.xlu0 %361
    %v363 = vlaneseq
    %v364 = vshrl.u32 %v363, 7
    %v365 = vsub.s32 1, %v364
    %v366 = vrot.slane %v333, %v365
    %368 = vbcast.lane.b32.xlu0 %v366, 256
    %v369 = vpop.permute.xlu0 %368
    %v372 = vmul.f32 %v278, %v362
    %v373 = vmul.f32 %v279, %v369
    %376 = vset.pattern.permute.xlu0 0
    %377 = vperm.xlu0 %376, %v372
    %v378 = vpop.permute.xlu0 %377
    %379 = vset.pattern.permute.xlu0 0
    %380 = vperm.xlu0 %379, %v373
    %v381 = vpop.permute.xlu0 %380
    %v382 = vlaneseq
    %v383 = vshrl.u32 %v382, 7
    %v384 = vsub.s32 %v210, %v383
    %v385 = vrot.slane %v378, %v384
    %v386 = vlaneseq
    %v387 = vshrl.u32 %v386, 7
    %v388 = vsub.s32 %v210, %v387
    %v389 = vrot.slane %v381, %v388
    %v390 = vsel %vm219, %v389, %v385
    %v392 = vsel %vm222, %v390, 0.0
    %393 = vadd.xlane.f32.xlu0 %v392
    %v394 = vpop.xlane.xlu0 %393
    %v395 = vsel %vm222, %v354, 0.0
    %396 = vadd.xlane.f32.xlu0 %v395
    %v397 = vpop.xlane.xlu0 %396
    %v398 = vsub.f32 0.0, %v397
    %v401 = vlaneseq
    %v402 = vshrl.u32 %v401, 7
    %v403 = vsub.s32 %v210, %v402
    %v404 = vrot.slane %v178, %v403
    %v405 = vlaneseq
    %v406 = vshrl.u32 %v405, 7
    %v407 = vsub.s32 %v210, %v406
    %v408 = vrot.slane %v179, %v407
    %v409 = vsel %vm219, %v408, %v404
    %v411 = vsel %vm222, %v409, 0.0
    %412 = vadd.xlane.f32.xlu0 %v411
    %v413 = vpop.xlane.xlu0 %412
    %v414 = vrcp.pop 8.0
    %v415 = vmul.f32 %v413, %v414
    %vm416 = vcmp.eq.s32.totalorder %v210, 0
    %v417 = vsel %vm416, %v394, 0.0
    %vm418 = vcmp.eq.s32.totalorder %v210, 1
    %v419 = vsel %vm418, %v398, 0.0
    %v420 = vadd.f32 %v417, %v419
    %vm421 = vcmp.eq.s32.totalorder %v210, 2
    %v422 = vsel %vm421, %v415, 0.0
    %v423 = vadd.f32 %v420, %v422
    %vm424 = vcmp.eq.s32.totalorder %v210, 3
    %v425 = vcvt.s32.f32 %v330
    %v426 = vsel %vm424, %v425, 0.0
    %v427 = vadd.f32 %v423, %v426
    %428 = vst.msk [vmem:[#allocation9] sm:$0x3] %vm222, %v427
    %v431 = vlaneseq
    %v432 = vshrl.u32 %v431, 7
    %v433 = vsub.s32 %v210, %v432
    %v434 = vrot.slane %v160, %v433
    %v435 = vlaneseq
    %v436 = vshrl.u32 %v435, 7
    %v437 = vsub.s32 %v210, %v436
    %v438 = vrot.slane %v161, %v437
    %v439 = vsel %vm219, %v438, %v434
    %441 = vst.msk [vmem:[#allocation10] sm:$0x3] %vm222, %v439
    // Predicated region
    $region42: #{tpu_custom_call.1} parent=1 // pred_check
      _
    $region43: #{tpu_custom_call.1} parent=1 // pred_check_branch
      %443 = sbr.rel (0) target = $region45
    $region44: #{tpu_custom_call.1} parent=1 // pred_region
      %s445 = ssub.s32 32, 32
      %446 = vsyncadd [#allocation4], %s445
      %s448 = sshll.u32 [#allocation9], 4
      %s449 = int_to_ptr.vmem [resolvable:$true] %s448
      %451 = dma.vmem_to_hbm [thread:$0]  %s449, 32, %s7, [#allocation4]
    $region45: #{tpu_custom_call.1} parent=1 // pred_fallthru
      _
    // Predicated region
    $region46: #{tpu_custom_call.1} parent=1 // pred_check
      _
    $region47: #{tpu_custom_call.1} parent=1 // pred_check_branch
      %453 = sbr.rel (0) target = $region49
    $region48: #{tpu_custom_call.1} parent=1 // pred_region
      %s455 = ssub.s32 32, 32
      %456 = vsyncadd [#allocation11], %s455
      %s458 = sshll.u32 [#allocation10], 4
      %s459 = int_to_ptr.vmem [resolvable:$true] %s458
      %461 = dma.vmem_to_hbm [thread:$0]  %s459, 32, %s8, [#allocation11]
    $region49: #{tpu_custom_call.1} parent=1 // pred_fallthru
      _
    // Predicated region
    $region50: #{tpu_custom_call.1} parent=1 // pred_check
      _
    $region51: #{tpu_custom_call.1} parent=1 // pred_check_branch
      %463 = sbr.rel (0) target = $region53
    $region52: #{tpu_custom_call.1} parent=1 // pred_region
      %464 = dma.done [#allocation4], 32
    $region53: #{tpu_custom_call.1} parent=1 // pred_fallthru
      _
    // Predicated region
    $region54: #{tpu_custom_call.1} parent=1 // pred_check
      _
    $region55: #{tpu_custom_call.1} parent=1 // pred_check_branch
      %466 = sbr.rel (0) target = $region57
    $region56: #{tpu_custom_call.1} parent=1 // pred_region
      %467 = dma.done [#allocation11], 32
    $region57: #{tpu_custom_call.1} parent=1 // pred_fallthru
      _
    %468 = vsyncpa [#allocation3], 1
    %469 = vsyncpa [#allocation7], 1
    %470 = vsyncpa [#allocation4], 1
    %471 = vsyncpa [#allocation11], 1
    %472 = vsyncpa [#allocation5], 1

</llo_original>
